<compile_context>
chip_gen: v5e
topology: v5e:2x2
jax: 0.10.0
libtpu: 0.0.40
codegen_flags: <defaults>
</compile_context>

<pallas_src>
import jax
import jax.numpy as jnp
from jax.experimental import pallas as pl
from jax.experimental.pallas import tpu as pltpu


_DEFAULT_VMEM_BUDGET = 16 * 1024 * 1024   # target per-step pipelined footprint
_VMEM_LIMIT_BYTES = 32 * 1024 * 1024      # safe on v5e/v6e/v7x (v7x default)


def _round_down(x, m):
    return (x // m) * m


def _pe_add_3d_kernel(x_ref, pe_ref, out_ref):
    # x_ref: (B, TS, D); pe_ref: (TS, D); out_ref: (B, TS, D)
    out_ref[...] = x_ref[...] + pe_ref[...][None, :, :]


def _pe_add_2d_kernel(x_ref, pe_ref, out_ref):
    # x_ref: (B, TF); pe_ref: (1, TF); out_ref: (B, TF)  (broadcast over batch)
    out_ref[...] = x_ref[...] + pe_ref[...]


def positional_encoding(x, pe, *, vmem_budget_bytes=_DEFAULT_VMEM_BUDGET,
                        donate_x=False):
    """x: [B, S, D]; pe: [S, D] (embedding weight). Returns x + pe[None]."""
    B, S, D = x.shape
    assert pe.shape == (S, D), (pe.shape, (S, D))
    pe = pe.astype(x.dtype)
    itemsize = jnp.dtype(x.dtype).itemsize

    if D % 128 == 0:
        # ---- lane-dense 3-D path: tile along the sequence axis --------------
        # Per-step double-buffered VMEM:
        #   2*(B*ts*D) [x] + 2*(B*ts*D) [out] + 2*(ts*D) [pe], all * itemsize.
        bytes_per_row = (4 * B + 2) * D * itemsize
        seq_tile = max(1, vmem_budget_bytes // bytes_per_row)
        # >= ~512 rows already hits ~85% of HBM roofline; bigger buys nothing.
        seq_tile = min(seq_tile, S, 1024)
        if S >= 16:
            # Guarantee >= 2 grid steps so the "parallel" axis shards across
            # both v7x TensorCores.
            seq_tile = min(seq_tile, max(8, _round_down(S // 2, 8)))
        if S >= 8:
            seq_tile = max(8, _round_down(seq_tile, 8))   # sublane-aligned
        else:
            seq_tile = S                                   # full extent (< 8)
        grid = (pl.cdiv(S, seq_tile),)   # masked partial last block is fine

        return pl.pallas_call(
            _pe_add_3d_kernel,
            out_shape=jax.ShapeDtypeStruct((B, S, D), x.dtype),
            grid_spec=pltpu.PrefetchScalarGridSpec(
                num_scalar_prefetch=0,
                grid=grid,
                in_specs=[
                    pl.BlockSpec((B, seq_tile, D), lambda i: (0, i, 0)),  # x
                    pl.BlockSpec((seq_tile, D), lambda i: (i, 0)),        # pe
                ],
                out_specs=pl.BlockSpec((B, seq_tile, D), lambda i: (0, i, 0)),
            ),
            compiler_params=pltpu.CompilerParams(
                dimension_semantics=("parallel",),
                vmem_limit_bytes=_VMEM_LIMIT_BYTES),
            input_output_aliases={0: 0} if donate_x else {},
        )(x, pe)

    # ---- fallback: d_model not a multiple of 128 -----------------------------
    # Flatten (S, D) so the output lane dimension is large and tiled in
    # 128-multiples -> unmasked full-vreg loads/stores regardless of D.
    F = S * D
    xf = x.reshape(B, F)
    pef = pe.reshape(1, F)

    bytes_per_lane = (4 * B + 2) * itemsize
    lane_tile = max(1, vmem_budget_bytes // bytes_per_lane)
    lane_tile = min(lane_tile, F, 512 * 1024)
    if F >= 256:
        # >= 2 parallel grid steps for v7x megacore.
        lane_tile = min(lane_tile, max(128, _round_down(F // 2, 128)))
    if F >= 128:
        lane_tile = max(128, _round_down(lane_tile, 128))
    else:
        lane_tile = F                  # tiny feature dim: full extent (masked)
    grid = (pl.cdiv(F, lane_tile),)

    out = pl.pallas_call(
        _pe_add_2d_kernel,
        out_shape=jax.ShapeDtypeStruct((B, F), x.dtype),
        grid_spec=pltpu.PrefetchScalarGridSpec(
            num_scalar_prefetch=0,
            grid=grid,
            in_specs=[
                pl.BlockSpec((B, lane_tile), lambda i: (0, i)),   # x (flat)
                pl.BlockSpec((1, lane_tile), lambda i: (0, i)),   # pe (flat)
            ],
            out_specs=pl.BlockSpec((B, lane_tile), lambda i: (0, i)),
        ),
        compiler_params=pltpu.CompilerParams(
            dimension_semantics=("parallel",),
            vmem_limit_bytes=_VMEM_LIMIT_BYTES),
        input_output_aliases={0: 0} if donate_x else {},
    )(xf, pef)
    return out.reshape(B, S, D)


def positional_encoding_reference(x, pe):
    """Pure-JAX reference mirroring the PyTorch forward."""
    return x + pe[None, :, :].astype(x.dtype)


if __name__ == "__main__":
    key = jax.random.PRNGKey(0)

    def _check(B, S, D):
        k = jax.random.fold_in(key, B * 10000 + S * 100 + D)
        kx, kp = jax.random.split(k)
        x = jax.random.normal(kx, (B, S, D), jnp.float32)
        pe = jax.random.normal(kp, (S, D), jnp.float32)  # nn.Embedding ~ N(0,1)
        out = jax.block_until_ready(positional_encoding(x, pe))
        ref = positional_encoding_reference(x, pe)
        assert out.shape == (B, S, D)
        assert jnp.allclose(out, ref, rtol=1e-6, atol=1e-6), float(
            jnp.max(jnp.abs(out - ref)))

    # Small shapes consistent with the module: batch=2, max_len=8, d_model=128.
    _check(2, 8, 128)
    # Longer sequence: >=2-step "parallel" grid + masked partial last block.
    _check(2, 20, 128)
    # d_model not a multiple of 128 -> lane-dense flattened path.
    _check(2, 8, 96)

    print("KERNEL_OK")
</pallas_src>

<mosaic_0001>
module attributes {stable_mosaic.version = 11 : i64} {
  func.func @_pe_add_3d_kernel(%arg0: i32, %arg1: memref<2x8x128xf32, #tpu.memory_space<vmem>>, %arg2: memref<8x128xf32, #tpu.memory_space<vmem>>, %arg3: memref<2x8x128xf32, #tpu.memory_space<vmem>>) attributes {dimension_semantics = [#tpu.dimension_semantics<parallel>], iteration_bounds = array<i64: 1>, scalar_prefetch = 0 : i64, scratch_operands = 0 : i64, tpu.core_type = #tpu.core_type<tc>, window_params = [{transform_indices = @transform_0, window_bounds = array<i64: 2, 8, 128>}, {transform_indices = @transform_1, window_bounds = array<i64: 8, 128>}, {transform_indices = @transform_2, window_bounds = array<i64: 2, 8, 128>}]} {
    %c0 = arith.constant 0 : index
    %c0_0 = arith.constant 0 : index
    %c0_1 = arith.constant 0 : index
    %0 = vector.load %arg1[%c0, %c0_0, %c0_1] : memref<2x8x128xf32, #tpu.memory_space<vmem>>, vector<2x8x128xf32>
    %c0_2 = arith.constant 0 : index
    %c0_3 = arith.constant 0 : index
    %1 = vector.load %arg2[%c0_2, %c0_3] : memref<8x128xf32, #tpu.memory_space<vmem>>, vector<8x128xf32>
    %2 = vector.shape_cast %1 : vector<8x128xf32> to vector<1x8x128xf32>
    %3 = vector.broadcast %2 : vector<1x8x128xf32> to vector<2x8x128xf32>
    %4 = arith.addf %0, %3 : vector<2x8x128xf32>
    %c0_4 = arith.constant 0 : index
    %c0_5 = arith.constant 0 : index
    %c0_6 = arith.constant 0 : index
    %5 = vector.load %arg3[%c0_4, %c0_5, %c0_6] : memref<2x8x128xf32, #tpu.memory_space<vmem>>, vector<2x8x128xf32>
    tpu.vector_store %arg3[%c0_4, %c0_5, %c0_6], %4 {strides = array<i32>} : memref<2x8x128xf32, #tpu.memory_space<vmem>>, vector<2x8x128xf32>,
    return
  }
  func.func @transform_0(%arg0: i32) -> (i32, i32, i32) {
    %c0_i32 = arith.constant 0 : i32
    %c0_i32_0 = arith.constant 0 : i32
    %c0_i32_1 = arith.constant 0 : i32
    return %c0_i32, %arg0, %c0_i32_0 : i32, i32, i32
  }
  func.func @transform_1(%arg0: i32) -> (i32, i32) {
    %c0_i32 = arith.constant 0 : i32
    %c0_i32_0 = arith.constant 0 : i32
    return %arg0, %c0_i32 : i32, i32
  }
  func.func @transform_2(%arg0: i32) -> (i32, i32, i32) {
    %c0_i32 = arith.constant 0 : i32
    %c0_i32_0 = arith.constant 0 : i32
    %c0_i32_1 = arith.constant 0 : i32
    return %c0_i32, %arg0, %c0_i32_0 : i32, i32, i32
  }
}

</mosaic_0001>

<llo_original>
// kernel: tpu_custom_call.1
$region0: #{tpu_custom_call.1}
  #allocation0 [shape = 'u32[]', space=smem, size = 0x4, offset = 0x4, fixed_abs, tag = 'smem constant byte address 0x4 - core index']
  #allocation1 [shape = 'u32[72,128]{1,0:T(1,128)}', space=vmem, size = 0x9000, scoped, tag = 'internal scratch']
  %s0 = inlined_call_operand.hbm [shape: f32[2,8,128], index: 0, kind: input, shape index: {}]
  %s1 = inlined_call_operand.hbm [shape: f32[8,128], index: 1, kind: input, shape index: {}]
  %s2 = inlined_call_operand.hbm [shape: f32[2,8,128], index: 2, kind: output, shape index: {}]
  %s3 = sld [smem:[#allocation0]]
  $region26: #{tpu_custom_call.1} parent=0
    _
  %s5 = ssub.s32 1, %s3
  %s6 = scalar_select 0, %s5, %s3
  $region1: #{tpu_custom_call.1} parent=0
    #allocation2 [shape = 'u8[8192]{0}', space=vmem, size = 0x2000, scoped, tag = 'input window, operand 0, single buffered']
    #allocation3 [shape = 's32[1]{0}', space=sflag, size = 0x4, scoped, tag = 'scoped memory for tpu_custom_call.1']
    #allocation4 [shape = 's32[1]{0}', space=sflag, size = 0x4, scoped, tag = 'scoped memory for tpu_custom_call.1']
    #allocation5 [shape = 'u8[4096]{0}', space=vmem, size = 0x1000, scoped, tag = 'input window, operand 1, single buffered']
    #allocation6 [shape = 's32[1]{0}', space=sflag, size = 0x4, scoped, tag = 'scoped memory for tpu_custom_call.1']
    #allocation7 [shape = 'u8[8192]{0}', space=vmem, size = 0x2000, scoped, tag = 'output window, operand 0, single buffered']
    %7 = vsyncpa [#allocation3], 0
    %8 = vsyncpa [#allocation6], 0
    %9 = vsyncpa [#allocation4], 0
    // Predicated region
    $region2: #{tpu_custom_call.1} parent=1 // pred_check
      _
    $region3: #{tpu_custom_call.1} parent=1 // pred_check_branch
      %11 = sbr.rel (0) target = $region5
    $region4: #{tpu_custom_call.1} parent=1 // pred_region
      %13 = vsyncadd [#allocation3], 0
      %s14 = sshll.u32 %s0, 4
      %s15 = int_to_ptr.hbm [resolvable:$true] %s14
      %s16 = sshll.u32 [#allocation2], 4
      %s17 = int_to_ptr.vmem [resolvable:$true] %s16
      %22 = dma.hbm_to_vmem [thread:$0]  %s15, 256, %s17, [#allocation3], 128, 128, 8
    $region5: #{tpu_custom_call.1} parent=1 // pred_fallthru
      _
    // Predicated region
    $region6: #{tpu_custom_call.1} parent=1 // pred_check
      _
    $region7: #{tpu_custom_call.1} parent=1 // pred_check_branch
      %24 = sbr.rel (0) target = $region9
    $region8: #{tpu_custom_call.1} parent=1 // pred_region
      %26 = vsyncadd [#allocation6], 0
      %s28 = sshll.u32 %s1, 4
      %s29 = int_to_ptr.hbm [resolvable:$true] %s28
      %s30 = sshll.u32 [#allocation5], 4
      %s31 = int_to_ptr.vmem [resolvable:$true] %s30
      %33 = dma.hbm_to_vmem [thread:$0]  %s29, 128, %s31, [#allocation6]
    $region9: #{tpu_custom_call.1} parent=1 // pred_fallthru
      _
    // Predicated region
    $region10: #{tpu_custom_call.1} parent=1 // pred_check
      _
    $region11: #{tpu_custom_call.1} parent=1 // pred_check_branch
      %35 = sbr.rel (0) target = $region13
    $region12: #{tpu_custom_call.1} parent=1 // pred_region
      %37 = dma.done [#allocation3], 256
    $region13: #{tpu_custom_call.1} parent=1 // pred_fallthru
      _
    // Predicated region
    $region14: #{tpu_custom_call.1} parent=1 // pred_check
      _
    $region15: #{tpu_custom_call.1} parent=1 // pred_check_branch
      %39 = sbr.rel (0) target = $region17
    $region16: #{tpu_custom_call.1} parent=1 // pred_region
      %41 = dma.done [#allocation6], 128
    $region17: #{tpu_custom_call.1} parent=1 // pred_fallthru
      _
    %v42 = vld [vmem:[#allocation2] sm:$0xff]
    %v43 = vld [vmem:[#allocation2 + $0x8] sm:$0xff]
    %v44 = vld [vmem:[#allocation5] sm:$0xff]
    %v45 = vadd.f32 %v42, %v44
    %v46 = vadd.f32 %v43, %v44
    %47 = vst [vmem:[#allocation7] sm:$0xff] %v45
    %48 = vst [vmem:[#allocation7 + $0x8] sm:$0xff] %v46
    // Predicated region
    $region18: #{tpu_custom_call.1} parent=1 // pred_check
      _
    $region19: #{tpu_custom_call.1} parent=1 // pred_check_branch
      %50 = sbr.rel (0) target = $region21
    $region20: #{tpu_custom_call.1} parent=1 // pred_region
      %52 = vsyncadd [#allocation4], 0
      %s53 = sshll.u32 [#allocation7], 4
      %s54 = int_to_ptr.vmem [resolvable:$true] %s53
      %s55 = sshll.u32 %s2, 4
      %s56 = int_to_ptr.hbm [resolvable:$true] %s55
      %61 = dma.vmem_to_hbm [thread:$0]  %s54, 256, %s56, [#allocation4], 128, 128, 8
    $region21: #{tpu_custom_call.1} parent=1 // pred_fallthru
      _
    // Predicated region
    $region22: #{tpu_custom_call.1} parent=1 // pred_check
      _
    $region23: #{tpu_custom_call.1} parent=1 // pred_check_branch
      %63 = sbr.rel (0) target = $region25
    $region24: #{tpu_custom_call.1} parent=1 // pred_region
      %65 = dma.done [#allocation4], 256
    $region25: #{tpu_custom_call.1} parent=1 // pred_fallthru
      _
    %66 = vsyncpa [#allocation3], 1
    %67 = vsyncpa [#allocation6], 1
    %68 = vsyncpa [#allocation4], 1

</llo_original>
